<compile_context>
chip_gen: v7x
topology: tpu7x:2x2x1
jax: 0.10.0
libtpu: 0.0.40
codegen_flags: <defaults>
</compile_context>

<pallas_src>
import jax
import jax.numpy as jnp
from jax import lax
from jax.experimental import pallas as pl
from jax.experimental.pallas import tpu as pltpu


def _dense_predictor_kernel(x_ref, w_ref, pred_ref):
    # forward(X) for one row tile: contract both operands over D (q·kᵀ form)
    # so the MXU result is already lane-dense as (1, tile_n).
    pred_ref[...] = lax.dot_general(
        w_ref[...],                 # (1, D)
        x_ref[...],                 # (tile_n, D)
        dimension_numbers=(((1,), (1,)), ((), ())),
        preferred_element_type=jnp.float32,
    )                               # -> (1, tile_n), f32


def _round_up(v, m):
    return ((v + m - 1) // m) * m


def _tpu_budgets():
    """Per-generation VMEM budgets for the double-buffered X stream."""
    try:
        kind = jax.devices()[0].device_kind.lower()
    except Exception:  # pragma: no cover - defensive
        kind = ""
    if "v7" in kind:
        # 64 MiB physical VMEM, 2 TensorCores/chip -> keep >=2 grid steps.
        return dict(x_budget=28 << 20, vmem_limit=44 << 20, vmem_cap=56 << 20,
                    keep_two_steps=True)
    if "v6" in kind or "v5p" in kind:
        # 128 MiB physical VMEM, 1 TensorCore.
        return dict(x_budget=48 << 20, vmem_limit=80 << 20, vmem_cap=110 << 20,
                    keep_two_steps=False)
    if "v5" in kind:
        # v5e / v5 lite: lowest HBM BW, 128 MiB physical but 16 MiB default
        # scoped limit -> raise the limit so tiles can grow.
        return dict(x_budget=24 << 20, vmem_limit=64 << 20, vmem_cap=110 << 20,
                    keep_two_steps=False)
    # Unknown chip: stay under every generation's default scoped limit and
    # keep two grid steps in case it is a multi-TensorCore part.
    return dict(x_budget=12 << 20, vmem_limit=32 << 20, vmem_cap=32 << 20,
                keep_two_steps=True)


def _pick_tiling(n, d, itemsize):
    """Rows per tile (multiple of 128, lane-dense output) + scoped-VMEM limit.

    VMEM accounting includes lane padding of the feature dim: a (tile_n, d)
    block occupies tile_n * round_up(d, 128) * itemsize bytes.
    """
    cfg = _tpu_budgets()
    d_lanes = _round_up(max(d, 1), 128)
    bytes_per_row = d_lanes * itemsize

    max_rows = cfg["x_budget"] // (2 * bytes_per_row)     # double-buffered X
    tile_n = max(128, (max_rows // 128) * 128)            # lane-dense, >=128
    tile_n = min(tile_n, _round_up(n, 128))                # at most one ragged tile
    if cfg["keep_two_steps"] and n > 128:
        # Keep >= 2 grid steps so both TensorCores get work on v7x.
        tile_n = min(tile_n, _round_up(-(-n // 2), 128))

    # Ensure the scoped-VMEM limit covers double-buffered X + out + headroom.
    # TODO(synk): for extremely large d even tile_n=128 may exceed physical
    # VMEM; that would need a D-split restructuring not done here.
    needed = 2 * tile_n * bytes_per_row + 2 * tile_n * 4 + (2 << 20)
    vmem_limit = min(max(cfg["vmem_limit"], needed), cfg["vmem_cap"])
    return int(tile_n), int(vmem_limit)


def dense_predictor_forward(x, w, pessimism=1.0, tile_n=None):
    """Returns (forward(X), forward_std(X), forward_pessimistic(X, pessimism)).

    x: (N, D) float32 or bfloat16 dense features (kept in their dtype)
    w: (D, 1) or (D,) linear-head weights (synthetic stand-in for forward)
    outputs: three (N,) float32 arrays
    """
    x = jnp.asarray(x)
    if x.dtype not in (jnp.float32, jnp.bfloat16):
        x = x.astype(jnp.float32)
    n, d = x.shape
    w = jnp.asarray(w)
    assert w.size == d
    w_row = w.astype(x.dtype).reshape(1, d)      # lane-dense, stays VMEM resident

    if tile_n is None:
        tile_n, vmem_limit = _pick_tiling(n, d, x.dtype.itemsize)
    else:
        d_lanes = _round_up(max(d, 1), 128)
        vmem_limit = min(
            2 * tile_n * d_lanes * x.dtype.itemsize + 2 * tile_n * 4 + (4 << 20),
            110 << 20)

    num_tiles = pl.cdiv(n, tile_n)

    cost = pl.CostEstimate(
        flops=2 * n * d,
        transcendentals=0,
        bytes_accessed=x.dtype.itemsize * (n * d + d) + 4 * n,
    )

    pred_row = pl.pallas_call(
        _dense_predictor_kernel,
        out_shape=jax.ShapeDtypeStruct((1, n), jnp.float32),
        grid=(num_tiles,),
        in_specs=[
            pl.BlockSpec((tile_n, d), lambda i: (i, 0)),   # X tile, pipelined over N
            pl.BlockSpec((1, d), lambda i: (0, 0)),        # w, resident
        ],
        out_specs=pl.BlockSpec((1, tile_n), lambda i: (0, i)),  # lane-dense row chunk
        compiler_params=pltpu.CompilerParams(
            dimension_semantics=("parallel",),
            vmem_limit_bytes=int(vmem_limit),
        ),
        cost_estimate=cost,
    )(x, w_row)

    pred = pred_row.reshape(-1)                  # (N,), no pad/slice round-trip

    # forward_std(X) == torch.zeros(X.shape[0]) — exact semantics, no kernel work.
    std = jnp.zeros((n,), dtype=jnp.float32)
    # forward_pessimistic = forward - pessimism * forward_std == forward (std ≡ 0).
    del pessimism
    pess = pred
    return pred, std, pess


if __name__ == "__main__":
    key = jax.random.PRNGKey(0)
    kx, kw = jax.random.split(key)

    # Small tabular batch: 2048 rows x 32 features.
    N, D = 2048, 32
    x = jax.random.normal(kx, (N, D), dtype=jnp.float32)
    # Deterministic synthetic parameters for the (abstract) forward head.
    w = jax.random.normal(kw, (D, 1), dtype=jnp.float32) * 0.1

    pred, std, pess = dense_predictor_forward(x, w, pessimism=1.0)
    jax.block_until_ready((pred, std, pess))

    # Reference semantics.
    ref_pred = (x @ w)[:, 0]
    ref_std = jnp.zeros((N,), dtype=jnp.float32)
    ref_pess = ref_pred - 1.0 * ref_std
    assert pred.shape == (N,) and std.shape == (N,) and pess.shape == (N,)
    assert jnp.allclose(std, ref_std)
    assert jnp.allclose(pred, ref_pred, atol=1e-4, rtol=1e-4)
    assert jnp.allclose(pess, ref_pess, atol=1e-4, rtol=1e-4)

    # Ragged (non-tile-multiple) N — handled by Pallas' masked last block, no pad copy.
    N2 = 300
    x2 = jax.random.normal(kx, (N2, D), dtype=jnp.float32)
    p2, s2, pe2 = dense_predictor_forward(x2, w)
    jax.block_until_ready((p2, s2, pe2))
    assert p2.shape == (N2,) and s2.shape == (N2,) and pe2.shape == (N2,)
    assert jnp.allclose(p2, (x2 @ w)[:, 0], atol=1e-4, rtol=1e-4)
    assert jnp.allclose(s2, jnp.zeros((N2,), jnp.float32))

    # bf16 inputs stream through without an f32 upcast (f32 accumulation on MXU).
    xb = x.astype(jnp.bfloat16)
    wb = w.astype(jnp.bfloat16)
    pb, sb, peb = dense_predictor_forward(xb, wb)
    jax.block_until_ready((pb, sb, peb))
    ref_b = (xb.astype(jnp.float32) @ wb.astype(jnp.float32))[:, 0]
    assert pb.dtype == jnp.float32 and pb.shape == (N,)
    assert jnp.allclose(pb, ref_b, atol=1e-2, rtol=1e-2)
    assert jnp.allclose(sb, jnp.zeros((N,), jnp.float32))

    print("KERNEL_OK")
</pallas_src>

<mosaic_0001>
module attributes {stable_mosaic.version = 11 : i64} {
  func.func @_dense_predictor_kernel(%arg0: i32, %arg1: memref<1024x32xf32, #tpu.memory_space<vmem>>, %arg2: memref<1x32xf32, #tpu.memory_space<vmem>>, %arg3: memref<1x1024xf32, #tpu.memory_space<vmem>>) attributes {dimension_semantics = [#tpu.dimension_semantics<parallel>], iteration_bounds = array<i64: 2>, scalar_prefetch = 0 : i64, scratch_operands = 0 : i64, tpu.core_type = #tpu.core_type<tc>, window_params = [{transform_indices = @transform_0, window_bounds = array<i64: 1024, 32>}, {pipeline_mode = #tpu.pipeline_mode<synchronous>, transform_indices = @transform_1, window_bounds = array<i64: 1, 32>}, {transform_indices = @transform_2, window_bounds = array<i64: 1, 1024>}]} {
    %c0 = arith.constant 0 : index
    %c0_0 = arith.constant 0 : index
    %0 = vector.load %arg2[%c0, %c0_0] : memref<1x32xf32, #tpu.memory_space<vmem>>, vector<1x32xf32>
    %c0_1 = arith.constant 0 : index
    %c0_2 = arith.constant 0 : index
    %1 = vector.load %arg1[%c0_1, %c0_2] : memref<1024x32xf32, #tpu.memory_space<vmem>>, vector<1024x32xf32>
    %cst = arith.constant dense<0.000000e+00> : vector<1x1024xf32>
    %2 = tpu.matmul %0, %1, %cst {dimension_numbers = #tpu.dot_dimension_numbers<[1], [1], [0], [0], [0, 0, 1, 0], [], []>} : vector<1x32xf32>, vector<1024x32xf32>, vector<1x1024xf32> -> vector<1x1024xf32>
    %c0_3 = arith.constant 0 : index
    %c0_4 = arith.constant 0 : index
    %3 = vector.load %arg3[%c0_3, %c0_4] : memref<1x1024xf32, #tpu.memory_space<vmem>>, vector<1x1024xf32>
    tpu.vector_store %arg3[%c0_3, %c0_4], %2 {strides = array<i32>} : memref<1x1024xf32, #tpu.memory_space<vmem>>, vector<1x1024xf32>,
    return
  }
  func.func @transform_0(%arg0: i32) -> (i32, i32) {
    %c0_i32 = arith.constant 0 : i32
    %c0_i32_0 = arith.constant 0 : i32
    return %arg0, %c0_i32 : i32, i32
  }
  func.func @transform_1(%arg0: i32) -> (i32, i32) {
    %c0_i32 = arith.constant 0 : i32
    %c0_i32_0 = arith.constant 0 : i32
    %c0_i32_1 = arith.constant 0 : i32
    return %c0_i32, %c0_i32_0 : i32, i32
  }
  func.func @transform_2(%arg0: i32) -> (i32, i32) {
    %c0_i32 = arith.constant 0 : i32
    %c0_i32_0 = arith.constant 0 : i32
    return %c0_i32, %arg0 : i32, i32
  }
}

</mosaic_0001>

<llo_original>
// kernel: tpu_custom_call.1
$region0: #{tpu_custom_call.1}
  #allocation0 [shape = 'u32[]', space=smem, size = 0x4, offset = 0x4, fixed_abs, tag = 'smem constant byte address 0x4 - core index']
  #allocation1 [shape = 'u32[144,128]{1,0:T(1,128)}', space=vmem, size = 0x12000, scoped, tag = 'internal scratch']
  %s0 = inlined_call_operand.vmem [shape: f32[2048,32], index: 0, kind: input, shape index: {}]
  %s1 = inlined_call_operand.vmem [shape: f32[1,32], index: 1, kind: input, shape index: {}]
  %s2 = inlined_call_operand.hbm [shape: f32[1,2048], index: 2, kind: output, shape index: {}]
  %s3 = sld [smem:[#allocation0]]
  $region41: #{tpu_custom_call.1} parent=0
    _
  %s5 = ssub.s32 1, %s3
  %s6 = scalar_select 0, %s5, %s3
  $region1: #{tpu_custom_call.1} parent=0
    #allocation2 [shape = 'u8[8192]{0}', space=vmem, size = 0x2000, scoped, tag = 'output window, operand 0']
    #allocation3 [shape = 's32[2]{0}', space=sflag, size = 0x8, scoped, tag = 'scoped memory for tpu_custom_call.1']
    %7 = vsyncpa [#allocation3], 0
    %s8 = scalar_lea.sflag [#allocation3], 1
    %9 = vsyncpa %s8, 0
    loop: start=0, step=1, limit=4
    $region2: #{tpu_custom_call.1} parent=1 // loop_pre_header
      _
    $region3: #{tpu_custom_call.1} parent=1 // loop_header
      %s11 = sphi 0, %s15
      %p12 = scmp.ge.s32.totalorder %s11, 4
      %s21 = sphi 0, %s23
      %s24 = sphi 0, %s21
      %s25 = sphi 0, %s24
      %s41 = sphi 0, %s25
      %s45 = sphi 0, %s45
      %s47 = sphi 0, %s45
      %s48 = sphi 0, %s47
      %s62 = sphi 0, %s48
      %s68 = sphi 0, %s70
      %s71 = sphi 0, %s68
      %s72 = sphi 0, %s71
      %s88 = sphi 0, %s72
    $region4: #{tpu_custom_call.1} parent=1 // loop_header_branch
      %14 = sbr.rel (%p12) target = $region8
    $region5: #{tpu_custom_call.1} parent=1 // loop_body
      %s16 = ssub.s32 %s11, 1
      %s17 = ssub.s32 %s11, 2
      %s18 = sadd.s32 %s11, 1
      %s19 = ssub.s32 %s11, %s18
      %p20 = scmp.eq.s32.totalorder %s19, 0
      %s22 = sadd.s32 %s21, 1
      %s23 = scalar_select %p20, %s21, %s22
      %p26 = pneg %p20
      %p27 = scmp.eq.s32.totalorder %s11, 1
      %p28 = por %p26, %p27
      %p29 = scmp.ne.s32.totalorder %s21, %s24
      %p30 = scmp.eq.s32.totalorder %s11, 0
      %p31 = por %p29, %p30
      %p32 = scmp.ne.s32.totalorder %s21, %s24
      %p33 = scmp.eq.s32.totalorder %s16, 1
      %p34 = por %p32, %p33
      %p35 = scmp.ne.s32.totalorder %s24, %s25
      %p36 = scmp.eq.s32.totalorder %s16, 0
      %p37 = por %p35, %p36
      %p38 = scmp.ne.s32.totalorder %s24, %s25
      %p39 = scmp.eq.s32.totalorder %s17, 1
      %p40 = por %p38, %p39
      %p42 = scmp.ne.s32.totalorder %s25, %s41
      %p43 = scmp.eq.s32.totalorder %s17, 0
      %p44 = por %p42, %p43
      %s46 = sadd.s32 %s45, 1
      %p49 = scmp.eq.s32.totalorder %s11, 1
      %p50 = scmp.ne.s32.totalorder %s45, %s47
      %p51 = scmp.eq.s32.totalorder %s11, 0
      %p52 = por %p50, %p51
      %p53 = scmp.ne.s32.totalorder %s45, %s47
      %p54 = scmp.eq.s32.totalorder %s16, 1
      %p55 = por %p53, %p54
      %p56 = scmp.ne.s32.totalorder %s47, %s48
      %p57 = scmp.eq.s32.totalorder %s16, 0
      %p58 = por %p56, %p57
      %p59 = scmp.ne.s32.totalorder %s47, %s48
      %p60 = scmp.eq.s32.totalorder %s17, 1
      %p61 = por %p59, %p60
      %p63 = scmp.ne.s32.totalorder %s48, %s62
      %p64 = scmp.eq.s32.totalorder %s17, 0
      %p65 = por %p63, %p64
      %s66 = ssub.s32 %s11, %s18
      %p67 = scmp.eq.s32.totalorder %s66, 0
      %s69 = sadd.s32 %s68, 1
      %s70 = scalar_select %p67, %s68, %s69
      %p73 = pneg %p67
      %p74 = scmp.eq.s32.totalorder %s11, 1
      %p75 = por %p73, %p74
      %p76 = scmp.ne.s32.totalorder %s68, %s71
      %p77 = scmp.eq.s32.totalorder %s11, 0
      %p78 = por %p76, %p77
      %p79 = scmp.ne.s32.totalorder %s68, %s71
      %p80 = scmp.eq.s32.totalorder %s16, 1
      %p81 = por %p79, %p80
      %p82 = scmp.ne.s32.totalorder %s71, %s72
      %p83 = scmp.eq.s32.totalorder %s16, 0
      %p84 = por %p82, %p83
      %p85 = scmp.ne.s32.totalorder %s71, %s72
      %p86 = scmp.eq.s32.totalorder %s17, 1
      %p87 = por %p85, %p86
      %p89 = scmp.ne.s32.totalorder %s72, %s88
      %p90 = scmp.eq.s32.totalorder %s17, 0
      %p91 = por %p89, %p90
      %p92 = scmp.le.s32.totalorder 1, %s11
      %p93 = scmp.lt.s32.totalorder %s11, 3
      %p94 = pnand %p92, %p93
      %p95 = pneg %p94
      // Predicated region
      $region9: #{tpu_custom_call.1} parent=5 // pred_check
        _
      $region10: #{tpu_custom_call.1} parent=5 // pred_check_branch
        %97 = sbr.rel (%p94) target = $region12
      $region11: #{tpu_custom_call.1} parent=5 // pred_region
        %s98 = ssub.s32 %s11, 1
        // Predicated region
        $region13: #{tpu_custom_call.1} parent=11 // pred_check
          %p99 = pneg %p58
        $region14: #{tpu_custom_call.1} parent=11 // pred_check_branch
          %101 = sbr.rel (%p99) target = $region16
        $region15: #{tpu_custom_call.1} parent=11 // pred_region
          _
        $region16: #{tpu_custom_call.1} parent=11 // pred_fallthru
          _
      $region12: #{tpu_custom_call.1} parent=5 // pred_fallthru
        _
      %p102 = scmp.lt.s32.totalorder %s11, 2
      // Predicated region
      $region17: #{tpu_custom_call.1} parent=5 // pred_check
        %p103 = pneg %p102
      $region18: #{tpu_custom_call.1} parent=5 // pred_check_branch
        %105 = sbr.rel (%p103) target = $region20
      $region19: #{tpu_custom_call.1} parent=5 // pred_region
        // Predicated region
        $region21: #{tpu_custom_call.1} parent=19 // pred_check
          %p106 = pneg %p31
        $region22: #{tpu_custom_call.1} parent=19 // pred_check_branch
          %108 = sbr.rel (%p106) target = $region24
        $region23: #{tpu_custom_call.1} parent=19 // pred_region
          %s109 = smul.u32 128, %s11
          %p110 = scmp.lt.s32.totalorder %s109, 255
          %s111 = scalar_select %p110, %s109, 255
          %s112 = smul.addr %s111, 8
          %s113 = scalar_lea.vmem %s0, %s112
          %s114 = smul.u32 128, %s11
        $region24: #{tpu_custom_call.1} parent=19 // pred_fallthru
          _
      $region20: #{tpu_custom_call.1} parent=5 // pred_fallthru
        _
      %p115 = scmp.le.s32.totalorder 1, %s11
      %p116 = scmp.lt.s32.totalorder %s11, 3
      %p117 = pnand %p115, %p116
      %p118 = pneg %p117
      // Predicated region
      $region25: #{tpu_custom_call.1} parent=5 // pred_check
        _
      $region26: #{tpu_custom_call.1} parent=5 // pred_check_branch
        %120 = sbr.rel (%p117) target = $region28
      $region27: #{tpu_custom_call.1} parent=5 // pred_region
        %s121 = ssub.s32 %s11, 1
        %s122 = smul.u32 128, %s16
        %p123 = scmp.lt.s32.totalorder %s122, 255
        %s124 = scalar_select %p123, %s122, 255
        %s125 = smul.addr %s124, 8
        %s126 = scalar_lea.vmem %s0, %s125
        %p127 = pneg %p37
        %p128 = pneg %p34
        %p129 = pneg %p58
        %p130 = pneg %p55
        %p131 = pneg %p84
        %p132 = pneg %p81
        %s133 = sand.u32 %s71, 1
        %s134 = scalar_lea.sflag [#allocation3], %s133
        %s135 = sand.u32 %s71, 1
        %s136 = smul.addr %s135, 8
        %s137 = scalar_lea.vmem [#allocation2], %s136
        %s138 = smul.u32 128, %s16
        %p139 = scmp.lt.s32.totalorder %s138, 255
        %s140 = scalar_select %p139, %s138, 255
        %s141 = smul.addr %s140, 8
        %s142 = scalar_lea.vmem %s0, %s141
        %s143 = smul.u32 128, %s16
        %s144 = smul.u32 8, %s16
        %v145 = vld [vmem:[%s1] sm:$0x1]
        %v146 = vld [vmem:[%s142] sm:$0xff]
        %v147 = vld [vmem:[%s142 + $0x8] sm:$0xff]
        %v148 = vld [vmem:[%s142 + $0x10] sm:$0xff]
        %v149 = vld [vmem:[%s142 + $0x18] sm:$0xff]
        %v150 = vld [vmem:[%s142 + $0x20] sm:$0xff]
        %v151 = vld [vmem:[%s142 + $0x28] sm:$0xff]
        %v152 = vld [vmem:[%s142 + $0x30] sm:$0xff]
        %v153 = vld [vmem:[%s142 + $0x38] sm:$0xff]
        %v154 = vld [vmem:[%s142 + $0x40] sm:$0xff]
        %v155 = vld [vmem:[%s142 + $0x48] sm:$0xff]
        %v156 = vld [vmem:[%s142 + $0x50] sm:$0xff]
        %v157 = vld [vmem:[%s142 + $0x58] sm:$0xff]
        %v158 = vld [vmem:[%s142 + $0x60] sm:$0xff]
        %v159 = vld [vmem:[%s142 + $0x68] sm:$0xff]
        %v160 = vld [vmem:[%s142 + $0x70] sm:$0xff]
        %v161 = vld [vmem:[%s142 + $0x78] sm:$0xff]
        %v162 = vld [vmem:[%s142 + $0x80] sm:$0xff]
        %v163 = vld [vmem:[%s142 + $0x88] sm:$0xff]
        %v164 = vld [vmem:[%s142 + $0x90] sm:$0xff]
        %v165 = vld [vmem:[%s142 + $0x98] sm:$0xff]
        %v166 = vld [vmem:[%s142 + $0xa0] sm:$0xff]
        %v167 = vld [vmem:[%s142 + $0xa8] sm:$0xff]
        %v168 = vld [vmem:[%s142 + $0xb0] sm:$0xff]
        %v169 = vld [vmem:[%s142 + $0xb8] sm:$0xff]
        %v170 = vld [vmem:[%s142 + $0xc0] sm:$0xff]
        %v171 = vld [vmem:[%s142 + $0xc8] sm:$0xff]
        %v172 = vld [vmem:[%s142 + $0xd0] sm:$0xff]
        %v173 = vld [vmem:[%s142 + $0xd8] sm:$0xff]
        %v174 = vld [vmem:[%s142 + $0xe0] sm:$0xff]
        %v175 = vld [vmem:[%s142 + $0xe8] sm:$0xff]
        %v176 = vld [vmem:[%s142 + $0xf0] sm:$0xff]
        %v177 = vld [vmem:[%s142 + $0xf8] sm:$0xff]
        %v178 = vld [vmem:[%s142 + $0x100] sm:$0xff]
        %v179 = vld [vmem:[%s142 + $0x108] sm:$0xff]
        %v180 = vld [vmem:[%s142 + $0x110] sm:$0xff]
        %v181 = vld [vmem:[%s142 + $0x118] sm:$0xff]
        %v182 = vld [vmem:[%s142 + $0x120] sm:$0xff]
        %v183 = vld [vmem:[%s142 + $0x128] sm:$0xff]
        %v184 = vld [vmem:[%s142 + $0x130] sm:$0xff]
        %v185 = vld [vmem:[%s142 + $0x138] sm:$0xff]
        %v186 = vld [vmem:[%s142 + $0x140] sm:$0xff]
        %v187 = vld [vmem:[%s142 + $0x148] sm:$0xff]
        %v188 = vld [vmem:[%s142 + $0x150] sm:$0xff]
        %v189 = vld [vmem:[%s142 + $0x158] sm:$0xff]
        %v190 = vld [vmem:[%s142 + $0x160] sm:$0xff]
        %v191 = vld [vmem:[%s142 + $0x168] sm:$0xff]
        %v192 = vld [vmem:[%s142 + $0x170] sm:$0xff]
        %v193 = vld [vmem:[%s142 + $0x178] sm:$0xff]
        %v194 = vld [vmem:[%s142 + $0x180] sm:$0xff]
        %v195 = vld [vmem:[%s142 + $0x188] sm:$0xff]
        %v196 = vld [vmem:[%s142 + $0x190] sm:$0xff]
        %v197 = vld [vmem:[%s142 + $0x198] sm:$0xff]
        %v198 = vld [vmem:[%s142 + $0x1a0] sm:$0xff]
        %v199 = vld [vmem:[%s142 + $0x1a8] sm:$0xff]
        %v200 = vld [vmem:[%s142 + $0x1b0] sm:$0xff]
        %v201 = vld [vmem:[%s142 + $0x1b8] sm:$0xff]
        %v202 = vld [vmem:[%s142 + $0x1c0] sm:$0xff]
        %v203 = vld [vmem:[%s142 + $0x1c8] sm:$0xff]
        %v204 = vld [vmem:[%s142 + $0x1d0] sm:$0xff]
        %v205 = vld [vmem:[%s142 + $0x1d8] sm:$0xff]
        %v206 = vld [vmem:[%s142 + $0x1e0] sm:$0xff]
        %v207 = vld [vmem:[%s142 + $0x1e8] sm:$0xff]
        %v208 = vld [vmem:[%s142 + $0x1f0] sm:$0xff]
        %v209 = vld [vmem:[%s142 + $0x1f8] sm:$0xff]
        %v210 = vld [vmem:[%s142 + $0x200] sm:$0xff]
        %v211 = vld [vmem:[%s142 + $0x208] sm:$0xff]
        %v212 = vld [vmem:[%s142 + $0x210] sm:$0xff]
        %v213 = vld [vmem:[%s142 + $0x218] sm:$0xff]
        %v214 = vld [vmem:[%s142 + $0x220] sm:$0xff]
        %v215 = vld [vmem:[%s142 + $0x228] sm:$0xff]
        %v216 = vld [vmem:[%s142 + $0x230] sm:$0xff]
        %v217 = vld [vmem:[%s142 + $0x238] sm:$0xff]
        %v218 = vld [vmem:[%s142 + $0x240] sm:$0xff]
        %v219 = vld [vmem:[%s142 + $0x248] sm:$0xff]
        %v220 = vld [vmem:[%s142 + $0x250] sm:$0xff]
        %v221 = vld [vmem:[%s142 + $0x258] sm:$0xff]
        %v222 = vld [vmem:[%s142 + $0x260] sm:$0xff]
        %v223 = vld [vmem:[%s142 + $0x268] sm:$0xff]
        %v224 = vld [vmem:[%s142 + $0x270] sm:$0xff]
        %v225 = vld [vmem:[%s142 + $0x278] sm:$0xff]
        %v226 = vld [vmem:[%s142 + $0x280] sm:$0xff]
        %v227 = vld [vmem:[%s142 + $0x288] sm:$0xff]
        %v228 = vld [vmem:[%s142 + $0x290] sm:$0xff]
        %v229 = vld [vmem:[%s142 + $0x298] sm:$0xff]
        %v230 = vld [vmem:[%s142 + $0x2a0] sm:$0xff]
        %v231 = vld [vmem:[%s142 + $0x2a8] sm:$0xff]
        %v232 = vld [vmem:[%s142 + $0x2b0] sm:$0xff]
        %v233 = vld [vmem:[%s142 + $0x2b8] sm:$0xff]
        %v234 = vld [vmem:[%s142 + $0x2c0] sm:$0xff]
        %v235 = vld [vmem:[%s142 + $0x2c8] sm:$0xff]
        %v236 = vld [vmem:[%s142 + $0x2d0] sm:$0xff]
        %v237 = vld [vmem:[%s142 + $0x2d8] sm:$0xff]
        %v238 = vld [vmem:[%s142 + $0x2e0] sm:$0xff]
        %v239 = vld [vmem:[%s142 + $0x2e8] sm:$0xff]
        %v240 = vld [vmem:[%s142 + $0x2f0] sm:$0xff]
        %v241 = vld [vmem:[%s142 + $0x2f8] sm:$0xff]
        %v242 = vld [vmem:[%s142 + $0x300] sm:$0xff]
        %v243 = vld [vmem:[%s142 + $0x308] sm:$0xff]
        %v244 = vld [vmem:[%s142 + $0x310] sm:$0xff]
        %v245 = vld [vmem:[%s142 + $0x318] sm:$0xff]
        %v246 = vld [vmem:[%s142 + $0x320] sm:$0xff]
        %v247 = vld [vmem:[%s142 + $0x328] sm:$0xff]
        %v248 = vld [vmem:[%s142 + $0x330] sm:$0xff]
        %v249 = vld [vmem:[%s142 + $0x338] sm:$0xff]
        %v250 = vld [vmem:[%s142 + $0x340] sm:$0xff]
        %v251 = vld [vmem:[%s142 + $0x348] sm:$0xff]
        %v252 = vld [vmem:[%s142 + $0x350] sm:$0xff]
        %v253 = vld [vmem:[%s142 + $0x358] sm:$0xff]
        %v254 = vld [vmem:[%s142 + $0x360] sm:$0xff]
        %v255 = vld [vmem:[%s142 + $0x368] sm:$0xff]
        %v256 = vld [vmem:[%s142 + $0x370] sm:$0xff]
        %v257 = vld [vmem:[%s142 + $0x378] sm:$0xff]
        %v258 = vld [vmem:[%s142 + $0x380] sm:$0xff]
        %v259 = vld [vmem:[%s142 + $0x388] sm:$0xff]
        %v260 = vld [vmem:[%s142 + $0x390] sm:$0xff]
        %v261 = vld [vmem:[%s142 + $0x398] sm:$0xff]
        %v262 = vld [vmem:[%s142 + $0x3a0] sm:$0xff]
        %v263 = vld [vmem:[%s142 + $0x3a8] sm:$0xff]
        %v264 = vld [vmem:[%s142 + $0x3b0] sm:$0xff]
        %v265 = vld [vmem:[%s142 + $0x3b8] sm:$0xff]
        %v266 = vld [vmem:[%s142 + $0x3c0] sm:$0xff]
        %v267 = vld [vmem:[%s142 + $0x3c8] sm:$0xff]
        %v268 = vld [vmem:[%s142 + $0x3d0] sm:$0xff]
        %v269 = vld [vmem:[%s142 + $0x3d8] sm:$0xff]
        %v270 = vld [vmem:[%s142 + $0x3e0] sm:$0xff]
        %v271 = vld [vmem:[%s142 + $0x3e8] sm:$0xff]
        %v272 = vld [vmem:[%s142 + $0x3f0] sm:$0xff]
        %v273 = vld [vmem:[%s142 + $0x3f8] sm:$0xff]
        %vm274 = vcmask 261120
        %v276 = vsel %vm274, %v145, 0
        %v279 = vsel %vm274, %v146, 0
        %v282 = vsel %vm274, %v147, 0
        %v285 = vsel %vm274, %v148, 0
        %v288 = vsel %vm274, %v149, 0
        %v291 = vsel %vm274, %v150, 0
        %v294 = vsel %vm274, %v151, 0
        %v297 = vsel %vm274, %v152, 0
        %v300 = vsel %vm274, %v153, 0
        %v303 = vsel %vm274, %v154, 0
        %v306 = vsel %vm274, %v155, 0
        %v309 = vsel %vm274, %v156, 0
        %v312 = vsel %vm274, %v157, 0
        %v315 = vsel %vm274, %v158, 0
        %v318 = vsel %vm274, %v159, 0
        %v321 = vsel %vm274, %v160, 0
        %v324 = vsel %vm274, %v161, 0
        %v327 = vsel %vm274, %v162, 0
        %v330 = vsel %vm274, %v163, 0
        %v333 = vsel %vm274, %v164, 0
        %v336 = vsel %vm274, %v165, 0
        %v339 = vsel %vm274, %v166, 0
        %v342 = vsel %vm274, %v167, 0
        %v345 = vsel %vm274, %v168, 0
        %v348 = vsel %vm274, %v169, 0
        %v351 = vsel %vm274, %v170, 0
        %v354 = vsel %vm274, %v171, 0
        %v357 = vsel %vm274, %v172, 0
        %v360 = vsel %vm274, %v173, 0
        %v363 = vsel %vm274, %v174, 0
        %v366 = vsel %vm274, %v175, 0
        %v369 = vsel %vm274, %v176, 0
        %v372 = vsel %vm274, %v177, 0
        %v375 = vsel %vm274, %v178, 0
        %v378 = vsel %vm274, %v179, 0
        %v381 = vsel %vm274, %v180, 0
        %v384 = vsel %vm274, %v181, 0
        %v387 = vsel %vm274, %v182, 0
        %v390 = vsel %vm274, %v183, 0
        %v393 = vsel %vm274, %v184, 0
        %v396 = vsel %vm274, %v185, 0
        %v399 = vsel %vm274, %v186, 0
        %v402 = vsel %vm274, %v187, 0
        %v405 = vsel %vm274, %v188, 0
        %v408 = vsel %vm274, %v189, 0
        %v411 = vsel %vm274, %v190, 0
        %v414 = vsel %vm274, %v191, 0
        %v417 = vsel %vm274, %v192, 0
        %v420 = vsel %vm274, %v193, 0
        %v423 = vsel %vm274, %v194, 0
        %v426 = vsel %vm274, %v195, 0
        %v429 = vsel %vm274, %v196, 0
        %v432 = vsel %vm274, %v197, 0
        %v435 = vsel %vm274, %v198, 0
        %v438 = vsel %vm274, %v199, 0
        %v441 = vsel %vm274, %v200, 0
        %v444 = vsel %vm274, %v201, 0
        %v447 = vsel %vm274, %v202, 0
        %v450 = vsel %vm274, %v203, 0
        %v453 = vsel %vm274, %v204, 0
        %v456 = vsel %vm274, %v205, 0
        %v459 = vsel %vm274, %v206, 0
        %v462 = vsel %vm274, %v207, 0
        %v465 = vsel %vm274, %v208, 0
        %v468 = vsel %vm274, %v209, 0
        %v471 = vsel %vm274, %v210, 0
        %v474 = vsel %vm274, %v211, 0
        %v477 = vsel %vm274, %v212, 0
        %v480 = vsel %vm274, %v213, 0
        %v483 = vsel %vm274, %v214, 0
        %v486 = vsel %vm274, %v215, 0
        %v489 = vsel %vm274, %v216, 0
        %v492 = vsel %vm274, %v217, 0
        %v495 = vsel %vm274, %v218, 0
        %v498 = vsel %vm274, %v219, 0
        %v501 = vsel %vm274, %v220, 0
        %v504 = vsel %vm274, %v221, 0
        %v507 = vsel %vm274, %v222, 0
        %v510 = vsel %vm274, %v223, 0
        %v513 = vsel %vm274, %v224, 0
        %v516 = vsel %vm274, %v225, 0
        %v519 = vsel %vm274, %v226, 0
        %v522 = vsel %vm274, %v227, 0
        %v525 = vsel %vm274, %v228, 0
        %v528 = vsel %vm274, %v229, 0
        %v531 = vsel %vm274, %v230, 0
        %v534 = vsel %vm274, %v231, 0
        %v537 = vsel %vm274, %v232, 0
        %v540 = vsel %vm274, %v233, 0
        %v543 = vsel %vm274, %v234, 0
        %v546 = vsel %vm274, %v235, 0
        %v549 = vsel %vm274, %v236, 0
        %v552 = vsel %vm274, %v237, 0
        %v555 = vsel %vm274, %v238, 0
        %v558 = vsel %vm274, %v239, 0
        %v561 = vsel %vm274, %v240, 0
        %v564 = vsel %vm274, %v241, 0
        %v567 = vsel %vm274, %v242, 0
        %v570 = vsel %vm274, %v243, 0
        %v573 = vsel %vm274, %v244, 0
        %v576 = vsel %vm274, %v245, 0
        %v579 = vsel %vm274, %v246, 0
        %v582 = vsel %vm274, %v247, 0
        %v585 = vsel %vm274, %v248, 0
        %v588 = vsel %vm274, %v249, 0
        %v591 = vsel %vm274, %v250, 0
        %v594 = vsel %vm274, %v251, 0
        %v597 = vsel %vm274, %v252, 0
        %v600 = vsel %vm274, %v253, 0
        %v603 = vsel %vm274, %v254, 0
        %v606 = vsel %vm274, %v255, 0
        %v609 = vsel %vm274, %v256, 0
        %v612 = vsel %vm274, %v257, 0
        %v615 = vsel %vm274, %v258, 0
        %v618 = vsel %vm274, %v259, 0
        %v621 = vsel %vm274, %v260, 0
        %v624 = vsel %vm274, %v261, 0
        %v627 = vsel %vm274, %v262, 0
        %v630 = vsel %vm274, %v263, 0
        %v633 = vsel %vm274, %v264, 0
        %v636 = vsel %vm274, %v265, 0
        %v639 = vsel %vm274, %v266, 0
        %v642 = vsel %vm274, %v267, 0
        %v645 = vsel %vm274, %v268, 0
        %v648 = vsel %vm274, %v269, 0
        %v651 = vsel %vm274, %v270, 0
        %v654 = vsel %vm274, %v271, 0
        %v657 = vsel %vm274, %v272, 0
        %v660 = vsel %vm274, %v273, 0
        %662 = vmatprep.subr.mxu0 0.0
        %663 = vmatpush1.xpose.msra.mxu0 %v279
        %664 = vmatprep.subr.mxu0 0.0
        %665 = vmatpush1.xpose.msra.mxu0 %v282
        %666 = vmatprep.subr.mxu0 0.0
        %667 = vmatpush1.xpose.msra.mxu0 %v285
        %668 = vmatprep.subr.mxu0 0.0
        %669 = vmatpush1.xpose.msra.mxu0 %v288
        %670 = vmatprep.subr.mxu0 0.0
        %671 = vmatpush1.xpose.msra.mxu0 %v291
        %672 = vmatprep.subr.mxu0 0.0
        %673 = vmatpush1.xpose.msra.mxu0 %v294
        %674 = vmatprep.subr.mxu0 0.0
        %675 = vmatpush1.xpose.msra.mxu0 %v297
        %676 = vmatprep.subr.mxu0 0.0
        %677 = vmatpush1.xpose.msra.mxu0 %v300
        %678 = vmatprep.subr.mxu0 0.0
        %679 = vmatpush1.xpose.msra.mxu0 %v303
        %680 = vmatprep.subr.mxu0 0.0
        %681 = vmatpush1.xpose.msra.mxu0 %v306
        %682 = vmatprep.subr.mxu0 0.0
        %683 = vmatpush1.xpose.msra.mxu0 %v309
        %684 = vmatprep.subr.mxu0 0.0
        %685 = vmatpush1.xpose.msra.mxu0 %v312
        %686 = vmatprep.subr.mxu0 0.0
        %687 = vmatpush1.xpose.msra.mxu0 %v315
        %688 = vmatprep.subr.mxu0 0.0
        %689 = vmatpush1.xpose.msra.mxu0 %v318
        %690 = vmatprep.subr.mxu0 0.0
        %691 = vmatpush1.xpose.msra.mxu0 %v321
        %692 = vmatprep.subr.mxu0 0.0
        %693 = vmatpush1.xpose.msra.mxu0 %v324
        %694 = vmatprep.subr.mxu0 0.0
        %695 = vmatpush1.xpose.msra.mxu0 %v327
        %696 = vmatprep.subr.mxu0 0.0
        %697 = vmatpush1.xpose.msra.mxu0 %v330
        %698 = vmatprep.subr.mxu0 0.0
        %699 = vmatpush1.xpose.msra.mxu0 %v333
        %700 = vmatprep.subr.mxu0 0.0
        %701 = vmatpush1.xpose.msra.mxu0 %v336
        %702 = vmatprep.subr.mxu0 0.0
        %703 = vmatpush1.xpose.msra.mxu0 %v339
        %704 = vmatprep.subr.mxu0 0.0
        %705 = vmatpush1.xpose.msra.mxu0 %v342
        %706 = vmatprep.subr.mxu0 0.0
        %707 = vmatpush1.xpose.msra.mxu0 %v345
        %708 = vmatprep.subr.mxu0 0.0
        %709 = vmatpush1.xpose.msra.mxu0 %v348
        %710 = vmatprep.subr.mxu0 0.0
        %711 = vmatpush1.xpose.msra.mxu0 %v351
        %712 = vmatprep.subr.mxu0 0.0
        %713 = vmatpush1.xpose.msra.mxu0 %v354
        %714 = vmatprep.subr.mxu0 0.0
        %715 = vmatpush1.xpose.msra.mxu0 %v357
        %716 = vmatprep.subr.mxu0 0.0
        %717 = vmatpush1.xpose.msra.mxu0 %v360
        %718 = vmatprep.subr.mxu0 0.0
        %719 = vmatpush1.xpose.msra.mxu0 %v363
        %720 = vmatprep.subr.mxu0 0.0
        %721 = vmatpush1.xpose.msra.mxu0 %v366
        %722 = vmatprep.subr.mxu0 0.0
        %723 = vmatpush1.xpose.msra.mxu0 %v369
        %724 = vmatprep.subr.mxu0 0.0
        %725 = vmatpush1.xpose.msra.mxu0 %v372
        %726 = vmatprep.mubr.f32.mxu0 0.0
        %727 = vmatmul.mubr.f32.gmra.mrb[0].mxu0 %v276
        %v728 = vpop.f32.mrb[0].mxu0
        %v729 = vadd.f32 0.0, %v728
        %v730 = vpop.f32.mrb[0].mxu0
        %v731 = vadd.f32 0.0, %v730
        %732 = vdwg.mxu0
        %733 = vmatprep.subr.mxu0 0.0
        %734 = vmatpush1.xpose.msra.mxu0 %v375
        %735 = vmatprep.subr.mxu0 0.0
        %736 = vmatpush1.xpose.msra.mxu0 %v378
        %737 = vmatprep.subr.mxu0 0.0
        %738 = vmatpush1.xpose.msra.mxu0 %v381
        %739 = vmatprep.subr.mxu0 0.0
        %740 = vmatpush1.xpose.msra.mxu0 %v384
        %741 = vmatprep.subr.mxu0 0.0
        %742 = vmatpush1.xpose.msra.mxu0 %v387
        %743 = vmatprep.subr.mxu0 0.0
        %744 = vmatpush1.xpose.msra.mxu0 %v390
        %745 = vmatprep.subr.mxu0 0.0
        %746 = vmatpush1.xpose.msra.mxu0 %v393
        %747 = vmatprep.subr.mxu0 0.0
        %748 = vmatpush1.xpose.msra.mxu0 %v396
        %749 = vmatprep.subr.mxu0 0.0
        %750 = vmatpush1.xpose.msra.mxu0 %v399
        %751 = vmatprep.subr.mxu0 0.0
        %752 = vmatpush1.xpose.msra.mxu0 %v402
        %753 = vmatprep.subr.mxu0 0.0
        %754 = vmatpush1.xpose.msra.mxu0 %v405
        %755 = vmatprep.subr.mxu0 0.0
        %756 = vmatpush1.xpose.msra.mxu0 %v408
        %757 = vmatprep.subr.mxu0 0.0
        %758 = vmatpush1.xpose.msra.mxu0 %v411
        %759 = vmatprep.subr.mxu0 0.0
        %760 = vmatpush1.xpose.msra.mxu0 %v414
        %761 = vmatprep.subr.mxu0 0.0
        %762 = vmatpush1.xpose.msra.mxu0 %v417
        %763 = vmatprep.subr.mxu0 0.0
        %764 = vmatpush1.xpose.msra.mxu0 %v420
        %765 = vmatprep.subr.mxu0 0.0
        %766 = vmatpush1.xpose.msra.mxu0 %v423
        %767 = vmatprep.subr.mxu0 0.0
        %768 = vmatpush1.xpose.msra.mxu0 %v426
        %769 = vmatprep.subr.mxu0 0.0
        %770 = vmatpush1.xpose.msra.mxu0 %v429
        %771 = vmatprep.subr.mxu0 0.0
        %772 = vmatpush1.xpose.msra.mxu0 %v432
        %773 = vmatprep.subr.mxu0 0.0
        %774 = vmatpush1.xpose.msra.mxu0 %v435
        %775 = vmatprep.subr.mxu0 0.0
        %776 = vmatpush1.xpose.msra.mxu0 %v438
        %777 = vmatprep.subr.mxu0 0.0
        %778 = vmatpush1.xpose.msra.mxu0 %v441
        %779 = vmatprep.subr.mxu0 0.0
        %780 = vmatpush1.xpose.msra.mxu0 %v444
        %781 = vmatprep.subr.mxu0 0.0
        %782 = vmatpush1.xpose.msra.mxu0 %v447
        %783 = vmatprep.subr.mxu0 0.0
        %784 = vmatpush1.xpose.msra.mxu0 %v450
        %785 = vmatprep.subr.mxu0 0.0
        %786 = vmatpush1.xpose.msra.mxu0 %v453
        %787 = vmatprep.subr.mxu0 0.0
        %788 = vmatpush1.xpose.msra.mxu0 %v456
        %789 = vmatprep.subr.mxu0 0.0
        %790 = vmatpush1.xpose.msra.mxu0 %v459
        %791 = vmatprep.subr.mxu0 0.0
        %792 = vmatpush1.xpose.msra.mxu0 %v462
        %793 = vmatprep.subr.mxu0 0.0
        %794 = vmatpush1.xpose.msra.mxu0 %v465
        %795 = vmatprep.subr.mxu0 0.0
        %796 = vmatpush1.xpose.msra.mxu0 %v468
        %797 = vmatprep.mubr.f32.mxu0 0.0
        %798 = vmatmul.mubr.f32.gmra.mrb[0].mxu0 %v276
        %v799 = vpop.f32.mrb[0].mxu0
        %v800 = vadd.f32 0.0, %v799
        %v801 = vpop.f32.mrb[0].mxu0
        %v802 = vadd.f32 0.0, %v801
        %803 = vdwg.mxu0
        %804 = vmatprep.subr.mxu0 0.0
        %805 = vmatpush1.xpose.msra.mxu0 %v471
        %806 = vmatprep.subr.mxu0 0.0
        %807 = vmatpush1.xpose.msra.mxu0 %v474
        %808 = vmatprep.subr.mxu0 0.0
        %809 = vmatpush1.xpose.msra.mxu0 %v477
        %810 = vmatprep.subr.mxu0 0.0
        %811 = vmatpush1.xpose.msra.mxu0 %v480
        %812 = vmatprep.subr.mxu0 0.0
        %813 = vmatpush1.xpose.msra.mxu0 %v483
        %814 = vmatprep.subr.mxu0 0.0
        %815 = vmatpush1.xpose.msra.mxu0 %v486
        %816 = vmatprep.subr.mxu0 0.0
        %817 = vmatpush1.xpose.msra.mxu0 %v489
        %818 = vmatprep.subr.mxu0 0.0
        %819 = vmatpush1.xpose.msra.mxu0 %v492
        %820 = vmatprep.subr.mxu0 0.0
        %821 = vmatpush1.xpose.msra.mxu0 %v495
        %822 = vmatprep.subr.mxu0 0.0
        %823 = vmatpush1.xpose.msra.mxu0 %v498
        %824 = vmatprep.subr.mxu0 0.0
        %825 = vmatpush1.xpose.msra.mxu0 %v501
        %826 = vmatprep.subr.mxu0 0.0
        %827 = vmatpush1.xpose.msra.mxu0 %v504
        %828 = vmatprep.subr.mxu0 0.0
        %829 = vmatpush1.xpose.msra.mxu0 %v507
        %830 = vmatprep.subr.mxu0 0.0
        %831 = vmatpush1.xpose.msra.mxu0 %v510
        %832 = vmatprep.subr.mxu0 0.0
        %833 = vmatpush1.xpose.msra.mxu0 %v513
        %834 = vmatprep.subr.mxu0 0.0
        %835 = vmatpush1.xpose.msra.mxu0 %v516
        %836 = vmatprep.subr.mxu0 0.0
        %837 = vmatpush1.xpose.msra.mxu0 %v519
        %838 = vmatprep.subr.mxu0 0.0
        %839 = vmatpush1.xpose.msra.mxu0 %v522
        %840 = vmatprep.subr.mxu0 0.0
        %841 = vmatpush1.xpose.msra.mxu0 %v525
        %842 = vmatprep.subr.mxu0 0.0
        %843 = vmatpush1.xpose.msra.mxu0 %v528
        %844 = vmatprep.subr.mxu0 0.0
        %845 = vmatpush1.xpose.msra.mxu0 %v531
        %846 = vmatprep.subr.mxu0 0.0
        %847 = vmatpush1.xpose.msra.mxu0 %v534
        %848 = vmatprep.subr.mxu0 0.0
        %849 = vmatpush1.xpose.msra.mxu0 %v537
        %850 = vmatprep.subr.mxu0 0.0
        %851 = vmatpush1.xpose.msra.mxu0 %v540
        %852 = vmatprep.subr.mxu0 0.0
        %853 = vmatpush1.xpose.msra.mxu0 %v543
        %854 = vmatprep.subr.mxu0 0.0
        %855 = vmatpush1.xpose.msra.mxu0 %v546
        %856 = vmatprep.subr.mxu0 0.0
        %857 = vmatpush1.xpose.msra.mxu0 %v549
        %858 = vmatprep.subr.mxu0 0.0
        %859 = vmatpush1.xpose.msra.mxu0 %v552
        %860 = vmatprep.subr.mxu0 0.0
        %861 = vmatpush1.xpose.msra.mxu0 %v555
        %862 = vmatprep.subr.mxu0 0.0
        %863 = vmatpush1.xpose.msra.mxu0 %v558
        %864 = vmatprep.subr.mxu0 0.0
        %865 = vmatpush1.xpose.msra.mxu0 %v561
        %866 = vmatprep.subr.mxu0 0.0
        %867 = vmatpush1.xpose.msra.mxu0 %v564
        %868 = vmatprep.mubr.f32.mxu0 0.0
        %869 = vmatmul.mubr.f32.gmra.mrb[0].mxu0 %v276
        %v870 = vpop.f32.mrb[0].mxu0
        %v871 = vadd.f32 0.0, %v870
        %v872 = vpop.f32.mrb[0].mxu0
        %v873 = vadd.f32 0.0, %v872
        %874 = vdwg.mxu0
        %875 = vmatprep.subr.mxu0 0.0
        %876 = vmatpush1.xpose.msra.mxu0 %v567
        %877 = vmatprep.subr.mxu0 0.0
        %878 = vmatpush1.xpose.msra.mxu0 %v570
        %879 = vmatprep.subr.mxu0 0.0
        %880 = vmatpush1.xpose.msra.mxu0 %v573
        %881 = vmatprep.subr.mxu0 0.0
        %882 = vmatpush1.xpose.msra.mxu0 %v576
        %883 = vmatprep.subr.mxu0 0.0
        %884 = vmatpush1.xpose.msra.mxu0 %v579
        %885 = vmatprep.subr.mxu0 0.0
        %886 = vmatpush1.xpose.msra.mxu0 %v582
        %887 = vmatprep.subr.mxu0 0.0
        %888 = vmatpush1.xpose.msra.mxu0 %v585
        %889 = vmatprep.subr.mxu0 0.0
        %890 = vmatpush1.xpose.msra.mxu0 %v588
        %891 = vmatprep.subr.mxu0 0.0
        %892 = vmatpush1.xpose.msra.mxu0 %v591
        %893 = vmatprep.subr.mxu0 0.0
        %894 = vmatpush1.xpose.msra.mxu0 %v594
        %895 = vmatprep.subr.mxu0 0.0
        %896 = vmatpush1.xpose.msra.mxu0 %v597
        %897 = vmatprep.subr.mxu0 0.0
        %898 = vmatpush1.xpose.msra.mxu0 %v600
        %899 = vmatprep.subr.mxu0 0.0
        %900 = vmatpush1.xpose.msra.mxu0 %v603
        %901 = vmatprep.subr.mxu0 0.0
        %902 = vmatpush1.xpose.msra.mxu0 %v606
        %903 = vmatprep.subr.mxu0 0.0
        %904 = vmatpush1.xpose.msra.mxu0 %v609
        %905 = vmatprep.subr.mxu0 0.0
        %906 = vmatpush1.xpose.msra.mxu0 %v612
        %907 = vmatprep.subr.mxu0 0.0
        %908 = vmatpush1.xpose.msra.mxu0 %v615
        %909 = vmatprep.subr.mxu0 0.0
        %910 = vmatpush1.xpose.msra.mxu0 %v618
        %911 = vmatprep.subr.mxu0 0.0
        %912 = vmatpush1.xpose.msra.mxu0 %v621
        %913 = vmatprep.subr.mxu0 0.0
        %914 = vmatpush1.xpose.msra.mxu0 %v624
        %915 = vmatprep.subr.mxu0 0.0
        %916 = vmatpush1.xpose.msra.mxu0 %v627
        %917 = vmatprep.subr.mxu0 0.0
        %918 = vmatpush1.xpose.msra.mxu0 %v630
        %919 = vmatprep.subr.mxu0 0.0
        %920 = vmatpush1.xpose.msra.mxu0 %v633
        %921 = vmatprep.subr.mxu0 0.0
        %922 = vmatpush1.xpose.msra.mxu0 %v636
        %923 = vmatprep.subr.mxu0 0.0
        %924 = vmatpush1.xpose.msra.mxu0 %v639
        %925 = vmatprep.subr.mxu0 0.0
        %926 = vmatpush1.xpose.msra.mxu0 %v642
        %927 = vmatprep.subr.mxu0 0.0
        %928 = vmatpush1.xpose.msra.mxu0 %v645
        %929 = vmatprep.subr.mxu0 0.0
        %930 = vmatpush1.xpose.msra.mxu0 %v648
        %931 = vmatprep.subr.mxu0 0.0
        %932 = vmatpush1.xpose.msra.mxu0 %v651
        %933 = vmatprep.subr.mxu0 0.0
        %934 = vmatpush1.xpose.msra.mxu0 %v654
        %935 = vmatprep.subr.mxu0 0.0
        %936 = vmatpush1.xpose.msra.mxu0 %v657
        %937 = vmatprep.subr.mxu0 0.0
        %938 = vmatpush1.xpose.msra.mxu0 %v660
        %939 = vmatprep.mubr.f32.mxu0 0.0
        %940 = vmatmul.mubr.f32.gmra.mrb[0].mxu0 %v276
        %v941 = vpop.f32.mrb[0].mxu0
        %v942 = vadd.f32 0.0, %v941
        %v943 = vpop.f32.mrb[0].mxu0
        %v944 = vadd.f32 0.0, %v943
        %945 = vdwg.mxu0
        %v954 = vcombine.low %v729, %v731
        %v955 = vcombine.low %v800, %v802
        %v956 = vcombine.low %v871, %v873
        %v957 = vcombine.low %v942, %v944
        %v959 = vunpack.c.l.s4 1966171168
        %v960 = vunpack.c.0.s8 %v959
        %v961 = vlaneseq
        %v962 = vshrl.u32 %v961, 7
        %v963 = vsub.s32 %v960, %v962
        %v964 = vrot.slane %v954, %v963
        %v966 = vunpack.c.l.s4 1966171168
        %v967 = vunpack.c.0.s8 %v966
        %v968 = vlaneseq
        %v969 = vshrl.u32 %v968, 7
        %v970 = vsub.s32 %v967, %v969
        %v971 = vrot.slane %v955, %v970
        %v973 = vunpack.c.l.s4 1966171168
        %v974 = vunpack.c.0.s8 %v973
        %v975 = vlaneseq
        %v976 = vshrl.u32 %v975, 7
        %v977 = vsub.s32 %v974, %v976
        %v978 = vrot.slane %v956, %v977
        %v980 = vunpack.c.l.s4 1966171168
        %v981 = vunpack.c.0.s8 %v980
        %v982 = vlaneseq
        %v983 = vshrl.u32 %v982, 7
        %v984 = vsub.s32 %v981, %v983
        %v985 = vrot.slane %v957, %v984
        %v986 = vcombine.low %v964, %v971
        %v987 = vcombine.low %v978, %v985
        %v989 = vunpack.c.l.s4 1966171168
        %v990 = vunpack.c.0.s8 %v989
        %v991 = vlaneseq
        %v992 = vshrl.u32 %v991, 7
        %v993 = vsub.s32 %v990, %v992
        %v994 = vrot.slane %v986, %v993
        %v996 = vunpack.c.l.s4 1966171168
        %v997 = vunpack.c.0.s8 %v996
        %v998 = vlaneseq
        %v999 = vshrl.u32 %v998, 7
        %v1000 = vsub.s32 %v997, %v999
        %v1001 = vrot.slane %v987, %v1000
        %v1002 = vcombine.low %v994, %v1001
        %1004 = vst [vmem:[%s137] sm:$0xff] %v1002
        %s1005 = sand.u32 %s71, 1
        %s1006 = scalar_lea.sflag [#allocation3], %s1005
        %s1007 = sand.u32 %s71, 1
        %s1008 = smul.addr %s1007, 8
        %s1009 = scalar_lea.vmem [#allocation2], %s1008
        // Predicated region
        $region29: #{tpu_custom_call.1} parent=27 // pred_check
          %p1010 = pneg %p81
        $region30: #{tpu_custom_call.1} parent=27 // pred_check_branch
          %1012 = sbr.rel (%p1010) target = $region32
        $region31: #{tpu_custom_call.1} parent=27 // pred_region
          %s1013 = smul.u32 8, %s16
          %s1015 = ssub.s32 128, 128
          %1016 = vsyncadd %s1006, %s1015
          %s1017 = smul.addr %s1013, 16
          %s1018 = scalar_lea.hbm %s2, %s1017
          %s1020 = sshll.u32 %s1009, 4
          %s1021 = int_to_ptr.vmem [resolvable:$true] %s1020
          %1023 = dma.vmem_to_hbm [thread:$0]  %s1021, 128, %s1018, %s1006
        $region32: #{tpu_custom_call.1} parent=27 // pred_fallthru
          _
      $region28: #{tpu_custom_call.1} parent=5 // pred_fallthru
        _
      %p1024 = scmp.le.s32.totalorder 2, %s11
      // Predicated region
      $region33: #{tpu_custom_call.1} parent=5 // pred_check
        %p1025 = pneg %p1024
      $region34: #{tpu_custom_call.1} parent=5 // pred_check_branch
        %1027 = sbr.rel (%p1025) target = $region36
      $region35: #{tpu_custom_call.1} parent=5 // pred_region
        %s1028 = ssub.s32 %s11, 2
        // Predicated region
        $region37: #{tpu_custom_call.1} parent=35 // pred_check
          %p1029 = pneg %p87
        $region38: #{tpu_custom_call.1} parent=35 // pred_check_branch
          %1031 = sbr.rel (%p1029) target = $region40
        $region39: #{tpu_custom_call.1} parent=35 // pred_region
          %s1032 = sand.u32 %s72, 1
          %s1033 = scalar_lea.sflag [#allocation3], %s1032
          %s1034 = sand.u32 %s72, 1
          %s1035 = smul.addr %s1034, 8
          %s1036 = scalar_lea.vmem [#allocation2], %s1035
          %1037 = dma.done %s1033, 128
        $region40: #{tpu_custom_call.1} parent=35 // pred_fallthru
          _
      $region36: #{tpu_custom_call.1} parent=5 // pred_fallthru
        _
    $region6: #{tpu_custom_call.1} parent=1 // loop_footer
      %s15 = sadd.s32 1, %s11
    $region7: #{tpu_custom_call.1} parent=1 // loop_footer_branch
      %10 = sbr.rel target = $region3
    $region8: #{tpu_custom_call.1} parent=1 // loop_exit
      _
    %1038 = vsyncpa [#allocation3], 1
    %s1039 = scalar_lea.sflag [#allocation3], 1
    %1040 = vsyncpa %s1039, 1

</llo_original>
